<compile_context>
chip_gen: v5e
topology: v5e:2x2
jax: 0.10.0
libtpu: 0.0.40
codegen_flags: <defaults>
</compile_context>

<pallas_src>
import functools

import jax
import jax.numpy as jnp
from jax.experimental import pallas as pl
from jax.experimental.pallas import tpu as pltpu


def _pos_enc_kernel(off_ref, wbig_ref, out_ref, *, max_rel, pack):
    # off_ref : (TILE_M, pack)          int32  -- pack consecutive offsets/row
    # wbig_ref: (pack*C, pack*E)        f32    -- block-diag table, bias folded
    # out_ref : (TILE_M, pack*E)        f32    -- lane-dense packed embeddings
    num_classes = 2 * max_rel + 1
    tile_m = off_ref.shape[0]

    d = jnp.clip(off_ref[...] + max_rel, 0, 2 * max_rel)        # (TILE_M, pack)

    # Combined one-hot index: slot j owns class range [j*C, (j+1)*C).
    slot = jax.lax.broadcasted_iota(jnp.int32, d.shape, 1)      # (TILE_M, pack)
    idx = slot * num_classes + d                                # (TILE_M, pack)

    col = jax.lax.broadcasted_iota(
        jnp.int32, (tile_m, pack * num_classes), 1)             # (TILE_M, pack*C)
    hit = col == idx[:, 0:1]
    for j in range(1, pack):                                    # unrolled, pack small
        hit = jnp.logical_or(hit, col == idx[:, j:j + 1])
    onehot = hit.astype(jnp.float32)                            # (TILE_M, pack*C)

    # MXU: (TILE_M, pack*C) @ (pack*C, pack*E); bias already folded into table.
    out_ref[...] = jnp.dot(onehot, wbig_ref[...],
                           preferred_element_type=jnp.float32)


def positional_encodings(offset, w, b, *, max_relative_feature, tile_rows=512):
    """offset: int array of arbitrary shape (e.g. (B, L, K)).
    w: (num_embeddings, 2*max_rel+1) linear weight (PyTorch layout).
    b: (num_embeddings,) linear bias.
    Returns float32 array of shape offset.shape + (num_embeddings,)."""
    num_embeddings, num_classes = w.shape
    assert num_classes == 2 * max_relative_feature + 1

    # Fold bias into the lookup table: row d of `table` is exactly W.T[d] + b.
    table = jnp.asarray(w, jnp.float32).T + jnp.asarray(b, jnp.float32)[None, :]

    # Packing factor so the output last dim is 128-lane dense (8 for E=16).
    if num_embeddings % 128 == 0 or 128 % num_embeddings != 0:
        pack = 1
    else:
        pack = 128 // num_embeddings

    # Block-diagonal table: (pack*C, pack*E), block j = table.
    w_big = jnp.kron(jnp.eye(pack, dtype=jnp.float32), table)

    orig_shape = offset.shape
    flat = offset.reshape(-1).astype(jnp.int32)
    n = flat.shape[0]

    m_rows = pl.cdiv(n, pack)                       # packed output rows needed
    # Big tiles amortize per-step overhead; keep grid >= 2 so both v7x cores run.
    tile_m = max(8, min(tile_rows, pl.cdiv(m_rows, 2)))
    tile_m = ((tile_m + 7) // 8) * 8                # sublane multiple
    m_pad = pl.cdiv(m_rows, tile_m) * tile_m
    n_pad = m_pad * pack
    if n_pad != n:                                  # pad only when ragged
        flat = jnp.pad(flat, (0, n_pad - n))
    off2 = flat.reshape(m_pad, pack)                # layout-identical reshape

    kernel = functools.partial(_pos_enc_kernel,
                               max_rel=max_relative_feature, pack=pack)

    out = pl.pallas_call(
        kernel,
        out_shape=jax.ShapeDtypeStruct((m_pad, pack * num_embeddings),
                                       jnp.float32),
        grid_spec=pltpu.PrefetchScalarGridSpec(
            num_scalar_prefetch=0,
            grid=(m_pad // tile_m,),
            in_specs=[
                pl.BlockSpec((tile_m, pack), lambda i: (i, 0)),
                pl.BlockSpec((pack * num_classes, pack * num_embeddings),
                             lambda i: (0, 0)),
            ],
            out_specs=pl.BlockSpec((tile_m, pack * num_embeddings),
                                   lambda i: (i, 0)),
        ),
        compiler_params=pltpu.CompilerParams(
            dimension_semantics=("parallel",)),
    )(off2, w_big)

    out = out.reshape(n_pad, num_embeddings)        # layout-identical reshape
    if n_pad != n:
        out = out[:n]
    return out.reshape(*orig_shape, num_embeddings)


def _reference(offset, w, b, max_rel):
    d = jnp.clip(offset + max_rel, 0, 2 * max_rel)
    onehot = jax.nn.one_hot(d, 2 * max_rel + 1, dtype=jnp.float32)
    return onehot @ w.T + b


if __name__ == "__main__":
    # Module config (small, consistent with the forward pass)
    num_embeddings = 16
    max_relative_feature = 32
    num_classes = 2 * max_relative_feature + 1  # 65

    key = jax.random.PRNGKey(0)
    k_w, k_b, k_off = jax.random.split(key, 3)

    # Deterministic synthetic parameters (PyTorch nn.Linear layout: (out, in))
    w = jax.random.normal(k_w, (num_embeddings, num_classes), jnp.float32) * 0.1
    b = jax.random.normal(k_b, (num_embeddings,), jnp.float32) * 0.1

    # offset: relative sequence offsets, shape (batch, seq, neighbors)
    B, L, K = 2, 8, 8
    offset = jax.random.randint(k_off, (B, L, K), -40, 40, dtype=jnp.int32)

    E = positional_encodings(offset, w, b,
                             max_relative_feature=max_relative_feature)
    E = jax.block_until_ready(E)
    E_ref = _reference(offset, w, b, max_relative_feature)
    assert E.shape == (B, L, K, num_embeddings)
    assert jnp.allclose(E, E_ref, atol=1e-5), "mismatch vs reference"

    # Ragged case: element count not a multiple of the packing factor / tile.
    off2 = jax.random.randint(jax.random.PRNGKey(1), (3, 5, 7), -40, 40,
                              dtype=jnp.int32)
    E2 = jax.block_until_ready(
        positional_encodings(off2, w, b,
                             max_relative_feature=max_relative_feature))
    E2_ref = _reference(off2, w, b, max_relative_feature)
    assert E2.shape == (3, 5, 7, num_embeddings)
    assert jnp.allclose(E2, E2_ref, atol=1e-5), "ragged mismatch vs reference"

    print("KERNEL_OK")
</pallas_src>

<mosaic_0001>
module attributes {stable_mosaic.version = 11 : i64} {
  func.func @_pos_enc_kernel(%arg0: i32, %arg1: memref<8x8xi32, #tpu.memory_space<vmem>>, %arg2: memref<520x128xf32, #tpu.memory_space<vmem>>, %arg3: memref<8x128xf32, #tpu.memory_space<vmem>>) attributes {dimension_semantics = [#tpu.dimension_semantics<parallel>], iteration_bounds = array<i64: 2>, scalar_prefetch = 0 : i64, scratch_operands = 0 : i64, tpu.core_type = #tpu.core_type<tc>, window_params = [{transform_indices = @transform_0, window_bounds = array<i64: 8, 8>}, {pipeline_mode = #tpu.pipeline_mode<synchronous>, transform_indices = @transform_1, window_bounds = array<i64: 520, 128>}, {transform_indices = @transform_2, window_bounds = array<i64: 8, 128>}]} {
    %c0 = arith.constant 0 : index
    %c0_0 = arith.constant 0 : index
    %0 = vector.load %arg1[%c0, %c0_0] : memref<8x8xi32, #tpu.memory_space<vmem>>, vector<8x8xi32>
    %c32_i32 = arith.constant 32 : i32
    %1 = vector.broadcast %c32_i32 : i32 to vector<8x8xi32>
    %2 = arith.addi %0, %1 : vector<8x8xi32>
    %c0_i32 = arith.constant 0 : i32
    %c64_i32 = arith.constant 64 : i32
    %3 = vector.broadcast %c0_i32 : i32 to vector<8x8xi32>
    %4 = arith.maxsi %3, %2 : vector<8x8xi32>
    %5 = vector.broadcast %c64_i32 : i32 to vector<8x8xi32>
    %6 = arith.minsi %5, %4 : vector<8x8xi32>
    %7 = tpu.iota {dimensions = array<i32: 1>} : vector<8x8xi32>
    %c65_i32 = arith.constant 65 : i32
    %8 = vector.broadcast %c65_i32 : i32 to vector<8x8xi32>
    %9 = arith.muli %7, %8 : vector<8x8xi32>
    %10 = arith.addi %9, %6 : vector<8x8xi32>
    %11 = tpu.iota {dimensions = array<i32: 1>} : vector<8x520xi32>
    %12 = vector.extract_strided_slice %10 {offsets = [0, 0], sizes = [8, 1], strides = [1, 1]} : vector<8x8xi32> to vector<8x1xi32>
    %13 = vector.broadcast %12 : vector<8x1xi32> to vector<8x520xi32>
    %14 = arith.cmpi eq, %11, %13 : vector<8x520xi32>
    %15 = vector.extract_strided_slice %10 {offsets = [0, 1], sizes = [8, 1], strides = [1, 1]} : vector<8x8xi32> to vector<8x1xi32>
    %16 = vector.broadcast %15 : vector<8x1xi32> to vector<8x520xi32>
    %17 = arith.cmpi eq, %11, %16 : vector<8x520xi32>
    %18 = arith.ori %14, %17 : vector<8x520xi1>
    %19 = vector.extract_strided_slice %10 {offsets = [0, 2], sizes = [8, 1], strides = [1, 1]} : vector<8x8xi32> to vector<8x1xi32>
    %20 = vector.broadcast %19 : vector<8x1xi32> to vector<8x520xi32>
    %21 = arith.cmpi eq, %11, %20 : vector<8x520xi32>
    %22 = arith.ori %18, %21 : vector<8x520xi1>
    %23 = vector.extract_strided_slice %10 {offsets = [0, 3], sizes = [8, 1], strides = [1, 1]} : vector<8x8xi32> to vector<8x1xi32>
    %24 = vector.broadcast %23 : vector<8x1xi32> to vector<8x520xi32>
    %25 = arith.cmpi eq, %11, %24 : vector<8x520xi32>
    %26 = arith.ori %22, %25 : vector<8x520xi1>
    %27 = vector.extract_strided_slice %10 {offsets = [0, 4], sizes = [8, 1], strides = [1, 1]} : vector<8x8xi32> to vector<8x1xi32>
    %28 = vector.broadcast %27 : vector<8x1xi32> to vector<8x520xi32>
    %29 = arith.cmpi eq, %11, %28 : vector<8x520xi32>
    %30 = arith.ori %26, %29 : vector<8x520xi1>
    %31 = vector.extract_strided_slice %10 {offsets = [0, 5], sizes = [8, 1], strides = [1, 1]} : vector<8x8xi32> to vector<8x1xi32>
    %32 = vector.broadcast %31 : vector<8x1xi32> to vector<8x520xi32>
    %33 = arith.cmpi eq, %11, %32 : vector<8x520xi32>
    %34 = arith.ori %30, %33 : vector<8x520xi1>
    %35 = vector.extract_strided_slice %10 {offsets = [0, 6], sizes = [8, 1], strides = [1, 1]} : vector<8x8xi32> to vector<8x1xi32>
    %36 = vector.broadcast %35 : vector<8x1xi32> to vector<8x520xi32>
    %37 = arith.cmpi eq, %11, %36 : vector<8x520xi32>
    %38 = arith.ori %34, %37 : vector<8x520xi1>
    %39 = vector.extract_strided_slice %10 {offsets = [0, 7], sizes = [8, 1], strides = [1, 1]} : vector<8x8xi32> to vector<8x1xi32>
    %40 = vector.broadcast %39 : vector<8x1xi32> to vector<8x520xi32>
    %41 = arith.cmpi eq, %11, %40 : vector<8x520xi32>
    %42 = arith.ori %38, %41 : vector<8x520xi1>
    %43 = arith.extui %42 : vector<8x520xi1> to vector<8x520xi32>
    %44 = arith.sitofp %43 : vector<8x520xi32> to vector<8x520xf32>
    %c0_1 = arith.constant 0 : index
    %c0_2 = arith.constant 0 : index
    %45 = vector.load %arg2[%c0_1, %c0_2] : memref<520x128xf32, #tpu.memory_space<vmem>>, vector<520x128xf32>
    %cst = arith.constant dense<0.000000e+00> : vector<8x128xf32>
    %46 = tpu.matmul %44, %45, %cst {dimension_numbers = #tpu.dot_dimension_numbers<[1], [0], [0], [1], [0, 0, 1, 1], [], []>} : vector<8x520xf32>, vector<520x128xf32>, vector<8x128xf32> -> vector<8x128xf32>
    %c0_3 = arith.constant 0 : index
    %c0_4 = arith.constant 0 : index
    %47 = vector.load %arg3[%c0_3, %c0_4] : memref<8x128xf32, #tpu.memory_space<vmem>>, vector<8x128xf32>
    tpu.vector_store %arg3[%c0_3, %c0_4], %46 {strides = array<i32>} : memref<8x128xf32, #tpu.memory_space<vmem>>, vector<8x128xf32>,
    return
  }
  func.func @transform_0(%arg0: i32) -> (i32, i32) {
    %c0_i32 = arith.constant 0 : i32
    %c0_i32_0 = arith.constant 0 : i32
    return %arg0, %c0_i32 : i32, i32
  }
  func.func @transform_1(%arg0: i32) -> (i32, i32) {
    %c0_i32 = arith.constant 0 : i32
    %c0_i32_0 = arith.constant 0 : i32
    %c0_i32_1 = arith.constant 0 : i32
    return %c0_i32, %c0_i32_0 : i32, i32
  }
  func.func @transform_2(%arg0: i32) -> (i32, i32) {
    %c0_i32 = arith.constant 0 : i32
    %c0_i32_0 = arith.constant 0 : i32
    return %arg0, %c0_i32 : i32, i32
  }
}

</mosaic_0001>

<llo_original>
// kernel: tpu_custom_call.1
$region0: #{tpu_custom_call.1}
  #allocation0 [shape = 'u32[]', space=smem, size = 0x4, offset = 0x4, fixed_abs, tag = 'smem constant byte address 0x4 - core index']
  #allocation1 [shape = 'u32[72,128]{1,0:T(1,128)}', space=vmem, size = 0x9000, scoped, tag = 'internal scratch']
  %s0 = inlined_call_operand.vmem [shape: s32[16,8], index: 0, kind: input, shape index: {}]
  %s1 = inlined_call_operand.hbm [shape: f32[520,128], index: 1, kind: input, shape index: {}]
  %s2 = inlined_call_operand.hbm [shape: f32[16,128], index: 2, kind: output, shape index: {}]
  %s3 = sld [smem:[#allocation0]]
  $region45: #{tpu_custom_call.1} parent=0
    _
  %s5 = ssub.s32 1, %s3
  %s6 = scalar_select 0, %s5, %s3
  $region1: #{tpu_custom_call.1} parent=0
    #allocation2 [shape = 'u8[266240]{0}', space=vmem, size = 0x41000, scoped, tag = 'input window, operand 1, single buffered']
    #allocation3 [shape = 's32[2]{0}', space=sflag, size = 0x8, scoped, tag = 'scoped memory for tpu_custom_call.1']
    #allocation4 [shape = 's32[2]{0}', space=sflag, size = 0x8, scoped, tag = 'scoped memory for tpu_custom_call.1']
    #allocation5 [shape = 'u8[8192]{0}', space=vmem, size = 0x2000, scoped, tag = 'output window, operand 0']
    %7 = vsyncpa [#allocation3], 0
    %8 = vsyncpa [#allocation4], 0
    %s9 = scalar_lea.sflag [#allocation4], 1
    %10 = vsyncpa %s9, 0
    loop: start=0, step=1, limit=4
    $region2: #{tpu_custom_call.1} parent=1 // loop_pre_header
      _
    $region3: #{tpu_custom_call.1} parent=1 // loop_header
      %s12 = sphi 0, %s16
      %p13 = scmp.ge.s32.totalorder %s12, 4
      %s22 = sphi 0, %s24
      %s25 = sphi 0, %s22
      %s26 = sphi 0, %s25
      %s42 = sphi 0, %s26
      %s46 = sphi 0, %s46
      %s48 = sphi 0, %s46
      %s49 = sphi 0, %s48
      %s63 = sphi 0, %s49
      %s69 = sphi 0, %s71
      %s72 = sphi 0, %s69
      %s73 = sphi 0, %s72
      %s89 = sphi 0, %s73
    $region4: #{tpu_custom_call.1} parent=1 // loop_header_branch
      %15 = sbr.rel (%p13) target = $region8
    $region5: #{tpu_custom_call.1} parent=1 // loop_body
      %s17 = ssub.s32 %s12, 1
      %s18 = ssub.s32 %s12, 2
      %s19 = sadd.s32 %s12, 1
      %s20 = ssub.s32 %s12, %s19
      %p21 = scmp.eq.s32.totalorder %s20, 0
      %s23 = sadd.s32 %s22, 1
      %s24 = scalar_select %p21, %s22, %s23
      %p27 = pneg %p21
      %p28 = scmp.eq.s32.totalorder %s12, 1
      %p29 = por %p27, %p28
      %p30 = scmp.ne.s32.totalorder %s22, %s25
      %p31 = scmp.eq.s32.totalorder %s12, 0
      %p32 = por %p30, %p31
      %p33 = scmp.ne.s32.totalorder %s22, %s25
      %p34 = scmp.eq.s32.totalorder %s17, 1
      %p35 = por %p33, %p34
      %p36 = scmp.ne.s32.totalorder %s25, %s26
      %p37 = scmp.eq.s32.totalorder %s17, 0
      %p38 = por %p36, %p37
      %p39 = scmp.ne.s32.totalorder %s25, %s26
      %p40 = scmp.eq.s32.totalorder %s18, 1
      %p41 = por %p39, %p40
      %p43 = scmp.ne.s32.totalorder %s26, %s42
      %p44 = scmp.eq.s32.totalorder %s18, 0
      %p45 = por %p43, %p44
      %s47 = sadd.s32 %s46, 1
      %p50 = scmp.eq.s32.totalorder %s12, 1
      %p51 = scmp.ne.s32.totalorder %s46, %s48
      %p52 = scmp.eq.s32.totalorder %s12, 0
      %p53 = por %p51, %p52
      %p54 = scmp.ne.s32.totalorder %s46, %s48
      %p55 = scmp.eq.s32.totalorder %s17, 1
      %p56 = por %p54, %p55
      %p57 = scmp.ne.s32.totalorder %s48, %s49
      %p58 = scmp.eq.s32.totalorder %s17, 0
      %p59 = por %p57, %p58
      %p60 = scmp.ne.s32.totalorder %s48, %s49
      %p61 = scmp.eq.s32.totalorder %s18, 1
      %p62 = por %p60, %p61
      %p64 = scmp.ne.s32.totalorder %s49, %s63
      %p65 = scmp.eq.s32.totalorder %s18, 0
      %p66 = por %p64, %p65
      %s67 = ssub.s32 %s12, %s19
      %p68 = scmp.eq.s32.totalorder %s67, 0
      %s70 = sadd.s32 %s69, 1
      %s71 = scalar_select %p68, %s69, %s70
      %p74 = pneg %p68
      %p75 = scmp.eq.s32.totalorder %s12, 1
      %p76 = por %p74, %p75
      %p77 = scmp.ne.s32.totalorder %s69, %s72
      %p78 = scmp.eq.s32.totalorder %s12, 0
      %p79 = por %p77, %p78
      %p80 = scmp.ne.s32.totalorder %s69, %s72
      %p81 = scmp.eq.s32.totalorder %s17, 1
      %p82 = por %p80, %p81
      %p83 = scmp.ne.s32.totalorder %s72, %s73
      %p84 = scmp.eq.s32.totalorder %s17, 0
      %p85 = por %p83, %p84
      %p86 = scmp.ne.s32.totalorder %s72, %s73
      %p87 = scmp.eq.s32.totalorder %s18, 1
      %p88 = por %p86, %p87
      %p90 = scmp.ne.s32.totalorder %s73, %s89
      %p91 = scmp.eq.s32.totalorder %s18, 0
      %p92 = por %p90, %p91
      %p93 = scmp.le.s32.totalorder 1, %s12
      %p94 = scmp.lt.s32.totalorder %s12, 3
      %p95 = pnand %p93, %p94
      %p96 = pneg %p95
      // Predicated region
      $region9: #{tpu_custom_call.1} parent=5 // pred_check
        _
      $region10: #{tpu_custom_call.1} parent=5 // pred_check_branch
        %98 = sbr.rel (%p95) target = $region12
      $region11: #{tpu_custom_call.1} parent=5 // pred_region
        %s99 = ssub.s32 %s12, 1
        // Predicated region
        $region13: #{tpu_custom_call.1} parent=11 // pred_check
          %p100 = pneg %p59
        $region14: #{tpu_custom_call.1} parent=11 // pred_check_branch
          %102 = sbr.rel (%p100) target = $region16
        $region15: #{tpu_custom_call.1} parent=11 // pred_region
          %104 = vsyncadd [#allocation3], 0
          %s105 = sshll.u32 %s1, 4
          %s106 = int_to_ptr.hbm [resolvable:$true] %s105
          %s107 = sshll.u32 [#allocation2], 4
          %s108 = int_to_ptr.vmem [resolvable:$true] %s107
          %113 = dma.hbm_to_vmem [thread:$0]  %s106, 8320, %s108, [#allocation3], 128, 128, 8
        $region16: #{tpu_custom_call.1} parent=11 // pred_fallthru
          _
      $region12: #{tpu_custom_call.1} parent=5 // pred_fallthru
        _
      %p114 = scmp.lt.s32.totalorder %s12, 2
      // Predicated region
      $region17: #{tpu_custom_call.1} parent=5 // pred_check
        %p115 = pneg %p114
      $region18: #{tpu_custom_call.1} parent=5 // pred_check_branch
        %117 = sbr.rel (%p115) target = $region20
      $region19: #{tpu_custom_call.1} parent=5 // pred_region
        // Predicated region
        $region21: #{tpu_custom_call.1} parent=19 // pred_check
          %p118 = pneg %p32
        $region22: #{tpu_custom_call.1} parent=19 // pred_check_branch
          %120 = sbr.rel (%p118) target = $region24
        $region23: #{tpu_custom_call.1} parent=19 // pred_region
          %p121 = scmp.lt.s32.totalorder %s12, 1
          %s122 = scalar_select %p121, %s12, 1
          %s123 = smul.addr %s122, 8
          %s124 = scalar_lea.vmem %s0, %s123
        $region24: #{tpu_custom_call.1} parent=19 // pred_fallthru
          _
      $region20: #{tpu_custom_call.1} parent=5 // pred_fallthru
        _
      %p125 = scmp.le.s32.totalorder 1, %s12
      %p126 = scmp.lt.s32.totalorder %s12, 3
      %p127 = pnand %p125, %p126
      %p128 = pneg %p127
      // Predicated region
      $region25: #{tpu_custom_call.1} parent=5 // pred_check
        _
      $region26: #{tpu_custom_call.1} parent=5 // pred_check_branch
        %130 = sbr.rel (%p127) target = $region28
      $region27: #{tpu_custom_call.1} parent=5 // pred_region
        %s131 = ssub.s32 %s12, 1
        // Predicated region
        $region29: #{tpu_custom_call.1} parent=27 // pred_check
          %p132 = pneg %p59
        $region30: #{tpu_custom_call.1} parent=27 // pred_check_branch
          %134 = sbr.rel (%p132) target = $region32
        $region31: #{tpu_custom_call.1} parent=27 // pred_region
          %136 = dma.done [#allocation3], 8320
        $region32: #{tpu_custom_call.1} parent=27 // pred_fallthru
          _
        %p137 = scmp.lt.s32.totalorder %s17, 1
        %s138 = scalar_select %p137, %s17, 1
        %s139 = smul.addr %s138, 8
        %s140 = scalar_lea.vmem %s0, %s139
        %p141 = pneg %p38
        %p142 = pneg %p35
        %p143 = pneg %p59
        %p144 = pneg %p56
        %p145 = pneg %p85
        %p146 = pneg %p82
        %s147 = sand.u32 %s72, 1
        %s148 = scalar_lea.sflag [#allocation4], %s147
        %s149 = sand.u32 %s72, 1
        %s150 = smul.addr %s149, 8
        %s151 = scalar_lea.vmem [#allocation5], %s150
        %p152 = scmp.lt.s32.totalorder %s17, 1
        %s153 = scalar_select %p152, %s17, 1
        %s154 = smul.addr %s153, 8
        %s155 = scalar_lea.vmem %s0, %s154
        %v156 = vld [vmem:[%s155] sm:$0xff]
        %v157 = vadd.s32 %v156, 32
        %vm158 = vcmp.gt.s32.totalorder %v157, 0
        %v159 = vsel %vm158, %v157, 0
        %vm160 = vcmp.lt.s32.totalorder %v159, 64
        %v161 = vsel %vm160, %v159, 64
        %v162 = vlaneseq
        %v163 = vand.u32 %v162, 127
        %v164 = vmul.u32 %v163, 65
        %v165 = vadd.s32 %v164, %v161
        %v166 = vadd.s32 %v163, 128
        %v167 = vadd.s32 %v163, 256
        %v168 = vadd.s32 %v163, 384
        %v169 = vadd.s32 %v163, 512
        %170 = vset.pattern.permute.xlu0 0
        %171 = vperm.xlu0 %170, %v165
        %v172 = vpop.permute.xlu0 %171
        %vm173 = vcmp.eq.s32.totalorder %v163, %v172
        %vm174 = vcmp.eq.s32.totalorder %v166, %v172
        %vm175 = vcmp.eq.s32.totalorder %v167, %v172
        %vm176 = vcmp.eq.s32.totalorder %v168, %v172
        %vm177 = vcmp.eq.s32.totalorder %v169, %v172
        %178 = vset.pattern.permute.xlu0 1
        %179 = vperm.xlu0 %178, %v165
        %v180 = vpop.permute.xlu0 %179
        %vm181 = vcmp.eq.s32.totalorder %v163, %v180
        %vm182 = vcmp.eq.s32.totalorder %v166, %v180
        %vm183 = vcmp.eq.s32.totalorder %v167, %v180
        %vm184 = vcmp.eq.s32.totalorder %v168, %v180
        %vm185 = vcmp.eq.s32.totalorder %v169, %v180
        %vm186 = vmor %vm173, %vm181
        %vm187 = vmor %vm174, %vm182
        %vm188 = vmor %vm175, %vm183
        %vm189 = vmor %vm176, %vm184
        %vm190 = vmor %vm177, %vm185
        %191 = vset.pattern.permute.xlu0 2
        %192 = vperm.xlu0 %191, %v165
        %v193 = vpop.permute.xlu0 %192
        %vm194 = vcmp.eq.s32.totalorder %v163, %v193
        %vm195 = vcmp.eq.s32.totalorder %v166, %v193
        %vm196 = vcmp.eq.s32.totalorder %v167, %v193
        %vm197 = vcmp.eq.s32.totalorder %v168, %v193
        %vm198 = vcmp.eq.s32.totalorder %v169, %v193
        %vm199 = vmor %vm186, %vm194
        %vm200 = vmor %vm187, %vm195
        %vm201 = vmor %vm188, %vm196
        %vm202 = vmor %vm189, %vm197
        %vm203 = vmor %vm190, %vm198
        %204 = vset.pattern.permute.xlu0 3
        %205 = vperm.xlu0 %204, %v165
        %v206 = vpop.permute.xlu0 %205
        %vm207 = vcmp.eq.s32.totalorder %v163, %v206
        %vm208 = vcmp.eq.s32.totalorder %v166, %v206
        %vm209 = vcmp.eq.s32.totalorder %v167, %v206
        %vm210 = vcmp.eq.s32.totalorder %v168, %v206
        %vm211 = vcmp.eq.s32.totalorder %v169, %v206
        %vm212 = vmor %vm199, %vm207
        %vm213 = vmor %vm200, %vm208
        %vm214 = vmor %vm201, %vm209
        %vm215 = vmor %vm202, %vm210
        %vm216 = vmor %vm203, %vm211
        %217 = vset.pattern.permute.xlu0 4
        %218 = vperm.xlu0 %217, %v165
        %v219 = vpop.permute.xlu0 %218
        %vm220 = vcmp.eq.s32.totalorder %v163, %v219
        %vm221 = vcmp.eq.s32.totalorder %v166, %v219
        %vm222 = vcmp.eq.s32.totalorder %v167, %v219
        %vm223 = vcmp.eq.s32.totalorder %v168, %v219
        %vm224 = vcmp.eq.s32.totalorder %v169, %v219
        %vm225 = vmor %vm212, %vm220
        %vm226 = vmor %vm213, %vm221
        %vm227 = vmor %vm214, %vm222
        %vm228 = vmor %vm215, %vm223
        %vm229 = vmor %vm216, %vm224
        %230 = vset.pattern.permute.xlu0 5
        %231 = vperm.xlu0 %230, %v165
        %v232 = vpop.permute.xlu0 %231
        %vm233 = vcmp.eq.s32.totalorder %v163, %v232
        %vm234 = vcmp.eq.s32.totalorder %v166, %v232
        %vm235 = vcmp.eq.s32.totalorder %v167, %v232
        %vm236 = vcmp.eq.s32.totalorder %v168, %v232
        %vm237 = vcmp.eq.s32.totalorder %v169, %v232
        %vm238 = vmor %vm225, %vm233
        %vm239 = vmor %vm226, %vm234
        %vm240 = vmor %vm227, %vm235
        %vm241 = vmor %vm228, %vm236
        %vm242 = vmor %vm229, %vm237
        %243 = vset.pattern.permute.xlu0 6
        %244 = vperm.xlu0 %243, %v165
        %v245 = vpop.permute.xlu0 %244
        %vm246 = vcmp.eq.s32.totalorder %v163, %v245
        %vm247 = vcmp.eq.s32.totalorder %v166, %v245
        %vm248 = vcmp.eq.s32.totalorder %v167, %v245
        %vm249 = vcmp.eq.s32.totalorder %v168, %v245
        %vm250 = vcmp.eq.s32.totalorder %v169, %v245
        %vm251 = vmor %vm238, %vm246
        %vm252 = vmor %vm239, %vm247
        %vm253 = vmor %vm240, %vm248
        %vm254 = vmor %vm241, %vm249
        %vm255 = vmor %vm242, %vm250
        %256 = vset.pattern.permute.xlu0 7
        %257 = vperm.xlu0 %256, %v165
        %v258 = vpop.permute.xlu0 %257
        %vm259 = vcmp.eq.s32.totalorder %v163, %v258
        %vm260 = vcmp.eq.s32.totalorder %v166, %v258
        %vm261 = vcmp.eq.s32.totalorder %v167, %v258
        %vm262 = vcmp.eq.s32.totalorder %v168, %v258
        %vm263 = vcmp.eq.s32.totalorder %v169, %v258
        %vm264 = vmor %vm251, %vm259
        %vm265 = vmor %vm252, %vm260
        %vm266 = vmor %vm253, %vm261
        %vm267 = vmor %vm254, %vm262
        %vm268 = vmor %vm255, %vm263
        %v269 = vsel %vm264, 1, 0
        %v270 = vsel %vm265, 1, 0
        %v271 = vsel %vm266, 1, 0
        %v272 = vsel %vm267, 1, 0
        %v273 = vsel %vm268, 1, 0
        %v274 = vcvt.s32.f32 %v269
        %v275 = vcvt.s32.f32 %v270
        %v276 = vcvt.s32.f32 %v271
        %v277 = vcvt.s32.f32 %v272
        %v278 = vcvt.s32.f32 %v273
        %v279 = vld [vmem:[#allocation2] sm:$0xff]
        %v280 = vld [vmem:[#allocation2 + $0x8] sm:$0xff]
        %v281 = vld [vmem:[#allocation2 + $0x10] sm:$0xff]
        %v282 = vld [vmem:[#allocation2 + $0x18] sm:$0xff]
        %v283 = vld [vmem:[#allocation2 + $0x20] sm:$0xff]
        %v284 = vld [vmem:[#allocation2 + $0x28] sm:$0xff]
        %v285 = vld [vmem:[#allocation2 + $0x30] sm:$0xff]
        %v286 = vld [vmem:[#allocation2 + $0x38] sm:$0xff]
        %v287 = vld [vmem:[#allocation2 + $0x40] sm:$0xff]
        %v288 = vld [vmem:[#allocation2 + $0x48] sm:$0xff]
        %v289 = vld [vmem:[#allocation2 + $0x50] sm:$0xff]
        %v290 = vld [vmem:[#allocation2 + $0x58] sm:$0xff]
        %v291 = vld [vmem:[#allocation2 + $0x60] sm:$0xff]
        %v292 = vld [vmem:[#allocation2 + $0x68] sm:$0xff]
        %v293 = vld [vmem:[#allocation2 + $0x70] sm:$0xff]
        %v294 = vld [vmem:[#allocation2 + $0x78] sm:$0xff]
        %v295 = vld [vmem:[#allocation2 + $0x80] sm:$0xff]
        %v296 = vld [vmem:[#allocation2 + $0x88] sm:$0xff]
        %v297 = vld [vmem:[#allocation2 + $0x90] sm:$0xff]
        %v298 = vld [vmem:[#allocation2 + $0x98] sm:$0xff]
        %v299 = vld [vmem:[#allocation2 + $0xa0] sm:$0xff]
        %v300 = vld [vmem:[#allocation2 + $0xa8] sm:$0xff]
        %v301 = vld [vmem:[#allocation2 + $0xb0] sm:$0xff]
        %v302 = vld [vmem:[#allocation2 + $0xb8] sm:$0xff]
        %v303 = vld [vmem:[#allocation2 + $0xc0] sm:$0xff]
        %v304 = vld [vmem:[#allocation2 + $0xc8] sm:$0xff]
        %v305 = vld [vmem:[#allocation2 + $0xd0] sm:$0xff]
        %v306 = vld [vmem:[#allocation2 + $0xd8] sm:$0xff]
        %v307 = vld [vmem:[#allocation2 + $0xe0] sm:$0xff]
        %v308 = vld [vmem:[#allocation2 + $0xe8] sm:$0xff]
        %v309 = vld [vmem:[#allocation2 + $0xf0] sm:$0xff]
        %v310 = vld [vmem:[#allocation2 + $0xf8] sm:$0xff]
        %v311 = vld [vmem:[#allocation2 + $0x100] sm:$0xff]
        %v312 = vld [vmem:[#allocation2 + $0x108] sm:$0xff]
        %v313 = vld [vmem:[#allocation2 + $0x110] sm:$0xff]
        %v314 = vld [vmem:[#allocation2 + $0x118] sm:$0xff]
        %v315 = vld [vmem:[#allocation2 + $0x120] sm:$0xff]
        %v316 = vld [vmem:[#allocation2 + $0x128] sm:$0xff]
        %v317 = vld [vmem:[#allocation2 + $0x130] sm:$0xff]
        %v318 = vld [vmem:[#allocation2 + $0x138] sm:$0xff]
        %v319 = vld [vmem:[#allocation2 + $0x140] sm:$0xff]
        %v320 = vld [vmem:[#allocation2 + $0x148] sm:$0xff]
        %v321 = vld [vmem:[#allocation2 + $0x150] sm:$0xff]
        %v322 = vld [vmem:[#allocation2 + $0x158] sm:$0xff]
        %v323 = vld [vmem:[#allocation2 + $0x160] sm:$0xff]
        %v324 = vld [vmem:[#allocation2 + $0x168] sm:$0xff]
        %v325 = vld [vmem:[#allocation2 + $0x170] sm:$0xff]
        %v326 = vld [vmem:[#allocation2 + $0x178] sm:$0xff]
        %v327 = vld [vmem:[#allocation2 + $0x180] sm:$0xff]
        %v328 = vld [vmem:[#allocation2 + $0x188] sm:$0xff]
        %v329 = vld [vmem:[#allocation2 + $0x190] sm:$0xff]
        %v330 = vld [vmem:[#allocation2 + $0x198] sm:$0xff]
        %v331 = vld [vmem:[#allocation2 + $0x1a0] sm:$0xff]
        %v332 = vld [vmem:[#allocation2 + $0x1a8] sm:$0xff]
        %v333 = vld [vmem:[#allocation2 + $0x1b0] sm:$0xff]
        %v334 = vld [vmem:[#allocation2 + $0x1b8] sm:$0xff]
        %v335 = vld [vmem:[#allocation2 + $0x1c0] sm:$0xff]
        %v336 = vld [vmem:[#allocation2 + $0x1c8] sm:$0xff]
        %v337 = vld [vmem:[#allocation2 + $0x1d0] sm:$0xff]
        %v338 = vld [vmem:[#allocation2 + $0x1d8] sm:$0xff]
        %v339 = vld [vmem:[#allocation2 + $0x1e0] sm:$0xff]
        %v340 = vld [vmem:[#allocation2 + $0x1e8] sm:$0xff]
        %v341 = vld [vmem:[#allocation2 + $0x1f0] sm:$0xff]
        %v342 = vld [vmem:[#allocation2 + $0x1f8] sm:$0xff]
        %v343 = vld [vmem:[#allocation2 + $0x200] sm:$0xff]
        %vm344 = vcmask 64512
        %v346 = vsel %vm344, %v278, 0
        %348 = vmatpush.msra.mxu0 %v294
        %349 = vmatpush.msra.mxu0 %v293
        %350 = vmatpush.msra.mxu0 %v292
        %351 = vmatpush.msra.mxu0 %v291
        %352 = vmatpush.msra.mxu0 %v290
        %353 = vmatpush.msra.mxu0 %v289
        %354 = vmatpush.msra.mxu0 %v288
        %355 = vmatpush.msra.mxu0 %v287
        %356 = vmatpush.msra.mxu0 %v286
        %357 = vmatpush.msra.mxu0 %v285
        %358 = vmatpush.msra.mxu0 %v284
        %359 = vmatpush.msra.mxu0 %v283
        %360 = vmatpush.msra.mxu0 %v282
        %361 = vmatpush.msra.mxu0 %v281
        %362 = vmatpush.msra.mxu0 %v280
        %363 = vmatpush.msra.mxu0 %v279
        %364 = vmatmul.f32.gmra.mxu0 %v274
        %v365 = vpop.f32.mrf.mxu0
        %v366 = vadd.f32 0.0, %v365
        %367 = vdwg.mxu0
        %368 = vmatpush.msra.mxu0 %v310
        %369 = vmatpush.msra.mxu0 %v309
        %370 = vmatpush.msra.mxu0 %v308
        %371 = vmatpush.msra.mxu0 %v307
        %372 = vmatpush.msra.mxu0 %v306
        %373 = vmatpush.msra.mxu0 %v305
        %374 = vmatpush.msra.mxu0 %v304
        %375 = vmatpush.msra.mxu0 %v303
        %376 = vmatpush.msra.mxu0 %v302
        %377 = vmatpush.msra.mxu0 %v301
        %378 = vmatpush.msra.mxu0 %v300
        %379 = vmatpush.msra.mxu0 %v299
        %380 = vmatpush.msra.mxu0 %v298
        %381 = vmatpush.msra.mxu0 %v297
        %382 = vmatpush.msra.mxu0 %v296
        %383 = vmatpush.msra.mxu0 %v295
        %384 = vmatmul.f32.gmra.mxu0 %v275
        %v385 = vpop.f32.mrf.mxu0
        %v386 = vadd.f32 %v366, %v385
        %387 = vdwg.mxu0
        %388 = vmatpush.msra.mxu0 %v326
        %389 = vmatpush.msra.mxu0 %v325
        %390 = vmatpush.msra.mxu0 %v324
        %391 = vmatpush.msra.mxu0 %v323
        %392 = vmatpush.msra.mxu0 %v322
        %393 = vmatpush.msra.mxu0 %v321
        %394 = vmatpush.msra.mxu0 %v320
        %395 = vmatpush.msra.mxu0 %v319
        %396 = vmatpush.msra.mxu0 %v318
        %397 = vmatpush.msra.mxu0 %v317
        %398 = vmatpush.msra.mxu0 %v316
        %399 = vmatpush.msra.mxu0 %v315
        %400 = vmatpush.msra.mxu0 %v314
        %401 = vmatpush.msra.mxu0 %v313
        %402 = vmatpush.msra.mxu0 %v312
        %403 = vmatpush.msra.mxu0 %v311
        %404 = vmatmul.f32.gmra.mxu0 %v276
        %v405 = vpop.f32.mrf.mxu0
        %v406 = vadd.f32 %v386, %v405
        %407 = vdwg.mxu0
        %408 = vmatpush.msra.mxu0 %v342
        %409 = vmatpush.msra.mxu0 %v341
        %410 = vmatpush.msra.mxu0 %v340
        %411 = vmatpush.msra.mxu0 %v339
        %412 = vmatpush.msra.mxu0 %v338
        %413 = vmatpush.msra.mxu0 %v337
        %414 = vmatpush.msra.mxu0 %v336
        %415 = vmatpush.msra.mxu0 %v335
        %416 = vmatpush.msra.mxu0 %v334
        %417 = vmatpush.msra.mxu0 %v333
        %418 = vmatpush.msra.mxu0 %v332
        %419 = vmatpush.msra.mxu0 %v331
        %420 = vmatpush.msra.mxu0 %v330
        %421 = vmatpush.msra.mxu0 %v329
        %422 = vmatpush.msra.mxu0 %v328
        %423 = vmatpush.msra.mxu0 %v327
        %424 = vmatmul.f32.gmra.mxu0 %v277
        %v425 = vpop.f32.mrf.mxu0
        %v426 = vadd.f32 %v406, %v425
        %427 = vdwg.mxu0
        %428 = vmatpush.msra.mxu0 0.0
        %429 = vmatpush.msra.mxu0 0.0
        %430 = vmatpush.msra.mxu0 0.0
        %431 = vmatpush.msra.mxu0 0.0
        %432 = vmatpush.msra.mxu0 0.0
        %433 = vmatpush.msra.mxu0 0.0
        %434 = vmatpush.msra.mxu0 0.0
        %435 = vmatpush.msra.mxu0 0.0
        %436 = vmatpush.msra.mxu0 0.0
        %437 = vmatpush.msra.mxu0 0.0
        %438 = vmatpush.msra.mxu0 0.0
        %439 = vmatpush.msra.mxu0 0.0
        %440 = vmatpush.msra.mxu0 0.0
        %441 = vmatpush.msra.mxu0 0.0
        %442 = vmatpush.msra.mxu0 0.0
        %443 = vmatpush.msra.mxu0 %v343
        %444 = vmatmul.f32.gmra.mxu0 %v346
        %v445 = vpop.f32.mrf.mxu0
        %v446 = vadd.f32 %v426, %v445
        %447 = vdwg.mxu0
        %448 = vst [vmem:[%s151] sm:$0xff] %v446
        %s449 = sand.u32 %s72, 1
        %s450 = scalar_lea.sflag [#allocation4], %s449
        %s451 = sand.u32 %s72, 1
        %s452 = smul.addr %s451, 8
        %s453 = scalar_lea.vmem [#allocation5], %s452
        // Predicated region
        $region33: #{tpu_custom_call.1} parent=27 // pred_check
          %p454 = pneg %p82
        $region34: #{tpu_custom_call.1} parent=27 // pred_check_branch
          %456 = sbr.rel (%p454) target = $region36
        $region35: #{tpu_custom_call.1} parent=27 // pred_region
          %458 = vsyncadd %s450, 0
          %s459 = smul.addr %s17, 8
          %s460 = scalar_lea.hbm %s2, %s459
          %s462 = sshll.u32 %s453, 4
          %s463 = int_to_ptr.vmem [resolvable:$true] %s462
          %s464 = sshll.u32 %s460, 4
          %s465 = int_to_ptr.hbm [resolvable:$true] %s464
          %467 = dma.vmem_to_hbm [thread:$0]  %s463, 128, %s465, %s450
        $region36: #{tpu_custom_call.1} parent=27 // pred_fallthru
          _
      $region28: #{tpu_custom_call.1} parent=5 // pred_fallthru
        _
      %p468 = scmp.le.s32.totalorder 2, %s12
      // Predicated region
      $region37: #{tpu_custom_call.1} parent=5 // pred_check
        %p469 = pneg %p468
      $region38: #{tpu_custom_call.1} parent=5 // pred_check_branch
        %471 = sbr.rel (%p469) target = $region40
      $region39: #{tpu_custom_call.1} parent=5 // pred_region
        %s472 = ssub.s32 %s12, 2
        // Predicated region
        $region41: #{tpu_custom_call.1} parent=39 // pred_check
          %p473 = pneg %p88
        $region42: #{tpu_custom_call.1} parent=39 // pred_check_branch
          %475 = sbr.rel (%p473) target = $region44
        $region43: #{tpu_custom_call.1} parent=39 // pred_region
          %s476 = sand.u32 %s73, 1
          %s477 = scalar_lea.sflag [#allocation4], %s476
          %s478 = sand.u32 %s73, 1
          %s479 = smul.addr %s478, 8
          %s480 = scalar_lea.vmem [#allocation5], %s479
          %482 = dma.done %s477, 128
        $region44: #{tpu_custom_call.1} parent=39 // pred_fallthru
          _
      $region40: #{tpu_custom_call.1} parent=5 // pred_fallthru
        _
    $region6: #{tpu_custom_call.1} parent=1 // loop_footer
      %s16 = sadd.s32 1, %s12
    $region7: #{tpu_custom_call.1} parent=1 // loop_footer_branch
      %11 = sbr.rel target = $region3
    $region8: #{tpu_custom_call.1} parent=1 // loop_exit
      _
    %483 = vsyncpa [#allocation3], 1
    %s484 = scalar_lea.sflag [#allocation3], 1
    %485 = vsyncpa %s484, 1
    %486 = vsyncpa [#allocation4], 1
    %s487 = scalar_lea.sflag [#allocation4], 1
    %488 = vsyncpa %s487, 1

</llo_original>
